<compile_context>
chip_gen: v5e
topology: v5e:2x2
jax: 0.10.0
libtpu: 0.0.40
codegen_flags: <defaults>
</compile_context>

<pallas_src>
import functools

import jax
import jax.numpy as jnp
from jax import lax
from jax.experimental import pallas as pl
from jax.experimental.pallas import tpu as pltpu


_LANE_CHUNK = 512          # lanes per inner compute chunk (4 f32 vregs / value)
_DEFAULT_TILE_C = 8192     # lanes per grid step -> 8*8192 = 65536 batch / step


def _mse_kernel(c_total, tiles_per_core, total_tiles,
                x_ref, y_ref, w_ref, b_ref, n_ref, o_ref):
    """Accumulate squared errors for one (13, 8, TILE_C) slab.

    x_ref : (13, 8, TILE_C) VMEM   lane/sublane-dense inputs
    y_ref : (8, TILE_C)     VMEM   targets, same flat layout as x
    w_ref : (13,)           SMEM   linear weights
    b_ref : (1,)            SMEM   bias
    n_ref : (1,)            SMEM   true batch size (runtime scalar)
    o_ref : (1, 8, TILE_C)  VMEM   per-core resident sum-of-squared-errors
    """
    g = pl.program_id(0)                      # megacore split ("parallel")
    t = pl.program_id(1)                      # reduction axis ("arbitrary")
    gt = g * tiles_per_core + t               # global tile index (may overhang)
    tile_c = x_ref.shape[2]

    # Zero this core's accumulator on its first reduction step.
    @pl.when(t == 0)
    def _():
        o_ref[...] = jnp.zeros_like(o_ref)

    wk = [w_ref[k] for k in range(13)]        # cheap SMEM scalar reads, hoisted
    bias = b_ref[0]
    n_true = n_ref[0]

    def accumulate(masked):
        # Chunk the lane axis so the K=13 accumulator stays in vregs (no VMEM
        # round-trips for intermediates); all slice starts/sizes are static.
        for c0 in range(0, tile_c, _LANE_CHUNK):
            cw = min(_LANE_CHUNK, tile_c - c0)
            sl = pl.ds(c0, cw)
            # K=13 contraction on the VPU: scalar(SMEM weight) * vector MACs.
            z = x_ref[0, :, sl] * wk[0]                       # (8, cw)
            for k in range(1, 13):
                z = z + x_ref[k, :, sl] * wk[k]
            d = jnp.tanh(z + bias) - y_ref[:, sl]             # EUP + VPU
            d2 = d * d
            if masked:
                lane = lax.broadcasted_iota(jnp.int32, d.shape, 1)
                sub = lax.broadcasted_iota(jnp.int32, d.shape, 0)
                col = gt * tile_c + c0 + lane                 # column in (8, C)
                flat = sub * c_total + col                    # original batch idx
                valid = (col < c_total) & (flat < n_true) & (gt < total_tiles)
                d2 = jnp.where(valid, d2, 0.0)
            o_ref[0, :, sl] += d2

    # Only the last real tile (ragged C tail + sublane tail) and the megacore
    # overhang tile can hold invalid elements; full tiles skip the mask filler.
    @pl.when(gt >= total_tiles - 1)
    def _():
        accumulate(True)

    @pl.when(gt < total_tiles - 1)
    def _():
        accumulate(False)


def _reseau1_packed(x_r, y_r, weight, bias, n_true, *, max_tile_c, num_parallel):
    """Core implementation on the packed layout x:(13,8,C), y:(8,C)."""
    k, eight, c_total = x_r.shape
    assert k == 13 and eight == 8 and y_r.shape == (8, c_total)
    assert max_tile_c >= 128 and max_tile_c % 128 == 0

    if c_total <= max_tile_c:
        tile_c = c_total            # single tile; full-dim block is always legal
    else:
        tile_c = max_tile_c         # 128-multiple; ragged tail handled by mask
    total_tiles = -(-c_total // tile_c)
    grid_par = num_parallel if (num_parallel > 1 and total_tiles >= num_parallel) else 1
    tpc = -(-total_tiles // grid_par)
    last = total_tiles - 1

    w_s = jnp.asarray(weight, jnp.float32).reshape(13)
    b_s = jnp.asarray(bias, jnp.float32).reshape(1)
    n_s = jnp.asarray(n_true, jnp.int32).reshape(1)

    kernel = functools.partial(_mse_kernel, c_total, tpc, total_tiles)

    partial_sums = pl.pallas_call(
        kernel,
        out_shape=jax.ShapeDtypeStruct((grid_par, 8, tile_c), jnp.float32),
        grid=(grid_par, tpc),
        in_specs=[
            pl.BlockSpec((13, 8, tile_c),
                         lambda g, t: (0, 0, jnp.minimum(g * tpc + t, last))),
            pl.BlockSpec((8, tile_c),
                         lambda g, t: (0, jnp.minimum(g * tpc + t, last))),
            pl.BlockSpec(memory_space=pltpu.MemorySpace.SMEM),   # weights (13,)
            pl.BlockSpec(memory_space=pltpu.MemorySpace.SMEM),   # bias (1,)
            pl.BlockSpec(memory_space=pltpu.MemorySpace.SMEM),   # n_true (1,)
        ],
        out_specs=pl.BlockSpec((1, 8, tile_c), lambda g, t: (g, 0, 0)),
        compiler_params=pltpu.CompilerParams(
            dimension_semantics=("parallel", "arbitrary"),
            vmem_limit_bytes=32 * 1024 * 1024),
    )(x_r, y_r, w_s, b_s, n_s)

    # Final mean: one tiny XLA reduce over (grid_par, 8, tile_c).
    return jnp.sum(partial_sums) / jnp.asarray(n_true, jnp.float32)


@functools.partial(jax.jit, static_argnames=("max_tile_c", "num_parallel"))
def reseau1_forward(x, y, weight, bias, *,
                    max_tile_c=_DEFAULT_TILE_C, num_parallel=1):
    """Torch-layout entry: x (N, 13), y (N, 1) [or (N,)], weight (1, 13), bias (1,).

    Does a single fused cast+transpose+pad pass over x (free reshapes after),
    then calls the packed kernel.
    """
    n, k = x.shape
    assert k == 13
    c_total = -(-n // 8)
    pad = 8 * c_total - n
    x_t = x.astype(jnp.float32).T                       # (13, N) -- one fused pass
    y_f = y.astype(jnp.float32).reshape(n)              # (N,)    -- free reshape
    if pad:
        x_t = jnp.pad(x_t, ((0, 0), (0, pad)))          # fuses with the transpose
        y_f = jnp.pad(y_f, (0, pad))
    x_r = x_t.reshape(13, 8, c_total)                   # free row-major reshape
    y_r = y_f.reshape(8, c_total)
    return _reseau1_packed(x_r, y_r, weight, bias, n,
                           max_tile_c=max_tile_c, num_parallel=num_parallel)


@functools.partial(jax.jit, static_argnames=("max_tile_c", "num_parallel"))
def reseau1_forward_packed(x_packed, y_packed, weight, bias, n_true, *,
                           max_tile_c=_DEFAULT_TILE_C, num_parallel=1):
    """Zero-copy entry for callers that already hold the lane-dense layout:
    x_packed (13, 8, C), y_packed (8, C) with C = ceil(N/8); n_true may be a
    runtime scalar (no recompile for varying N at fixed padded shape)."""
    return _reseau1_packed(x_packed, y_packed, weight, bias, n_true,
                           max_tile_c=max_tile_c, num_parallel=num_parallel)


if __name__ == "__main__":
    key = jax.random.PRNGKey(0)
    kx, ky, kw, kb = jax.random.split(key, 4)

    # Case 1: module exactly as specified (zero-initialized Linear), N = 8.
    N = 8
    x = jax.random.normal(kx, (N, 13), dtype=jnp.float32)
    y = jax.random.normal(ky, (N, 1), dtype=jnp.float32)
    weight = jnp.zeros((1, 13), dtype=jnp.float32)
    bias = jnp.zeros((1,), dtype=jnp.float32)

    res = reseau1_forward(x, y, weight, bias)
    jax.block_until_ready(res)
    ref = jnp.mean((jnp.tanh(x @ weight.T + bias) - y) ** 2)
    assert jnp.allclose(res, ref, rtol=1e-5, atol=1e-6), (res, ref)

    # Case 2: non-trivial weights, ragged N (sublane tail + ragged last C
    # tile), tiny tile and a two-core grid with an overhang tile
    # (C = 625, tile_c = 128, total_tiles = 5, tiles_per_core = 3).
    N2 = 4997
    x2 = jax.random.normal(kx, (N2, 13), dtype=jnp.float32)
    y2 = jax.random.normal(ky, (N2, 1), dtype=jnp.float32)
    w2 = 0.5 * jax.random.normal(kw, (1, 13), dtype=jnp.float32)
    b2 = 0.5 * jax.random.normal(kb, (1,), dtype=jnp.float32)

    res2 = reseau1_forward(x2, y2, w2, b2, max_tile_c=128, num_parallel=2)
    jax.block_until_ready(res2)
    ref2 = jnp.mean((jnp.tanh(x2 @ w2.T + b2) - y2) ** 2)
    assert jnp.allclose(res2, ref2, rtol=1e-5, atol=1e-5), (res2, ref2)

    # Case 3: zero-copy packed entry (caller already holds lane-dense layout).
    N3 = 1024
    x3 = jax.random.normal(kx, (N3, 13), dtype=jnp.float32)
    y3 = jax.random.normal(ky, (N3, 1), dtype=jnp.float32)
    C3 = N3 // 8
    x3_packed = x3.T.reshape(13, 8, C3)
    y3_packed = y3.reshape(-1).reshape(8, C3)

    res3 = reseau1_forward_packed(x3_packed, y3_packed, w2, b2, N3)
    jax.block_until_ready(res3)
    ref3 = jnp.mean((jnp.tanh(x3 @ w2.T + b2) - y3) ** 2)
    assert jnp.allclose(res3, ref3, rtol=1e-5, atol=1e-5), (res3, ref3)

    print("KERNEL_OK")
</pallas_src>

<mosaic_0001>
module attributes {stable_mosaic.version = 11 : i64} {
  func.func @_mse_kernel(%arg0: i32, %arg1: i32, %arg2: memref<13x8x1xf32, #tpu.memory_space<vmem>>, %arg3: memref<8x1xf32, #tpu.memory_space<vmem>>, %arg4: memref<13xf32, #tpu.memory_space<smem>>, %arg5: memref<1xf32, #tpu.memory_space<smem>>, %arg6: memref<1xi32, #tpu.memory_space<smem>>, %arg7: memref<1x8x1xf32, #tpu.memory_space<vmem>>) attributes {dimension_semantics = [#tpu.dimension_semantics<parallel>, #tpu.dimension_semantics<arbitrary>], iteration_bounds = array<i64: 1, 1>, scalar_prefetch = 0 : i64, scratch_operands = 0 : i64, tpu.core_type = #tpu.core_type<tc>, window_params = [{transform_indices = @transform_0, window_bounds = array<i64: 13, 8, 1>}, {transform_indices = @transform_1, window_bounds = array<i64: 8, 1>}, {transform_indices = @transform_2, window_bounds = array<i64: 13>}, {transform_indices = @transform_3, window_bounds = array<i64: 1>}, {transform_indices = @transform_4, window_bounds = array<i64: 1>}, {transform_indices = @transform_5, window_bounds = array<i64: 1, 8, 1>}]} {
    %c1_i32 = arith.constant 1 : i32
    %0 = arith.muli %arg0, %c1_i32 : i32
    %1 = arith.addi %0, %arg1 : i32
    %c0_i32 = arith.constant 0 : i32
    %2 = arith.cmpi eq, %arg1, %c0_i32 : i32
    %3 = arith.extui %2 : i1 to i32
    %c0_i32_0 = arith.constant 0 : i32
    %4 = arith.cmpi ne, %3, %c0_i32_0 : i32
    scf.if %4 {
      %cst = arith.constant 0.000000e+00 : f32
      %26 = vector.broadcast %cst : f32 to vector<1x8x1xf32>
      %c0_7 = arith.constant 0 : index
      %c0_8 = arith.constant 0 : index
      %c0_9 = arith.constant 0 : index
      %27 = vector.load %arg7[%c0_7, %c0_8, %c0_9] : memref<1x8x1xf32, #tpu.memory_space<vmem>>, vector<1x8x1xf32>
      tpu.vector_store %arg7[%c0_7, %c0_8, %c0_9], %26 {strides = array<i32>} : memref<1x8x1xf32, #tpu.memory_space<vmem>>, vector<1x8x1xf32>,
    } else {
    }
    %c0 = arith.constant 0 : index
    %5 = memref.load %arg4[%c0] : memref<13xf32, #tpu.memory_space<smem>>
    %c1 = arith.constant 1 : index
    %6 = memref.load %arg4[%c1] : memref<13xf32, #tpu.memory_space<smem>>
    %c2 = arith.constant 2 : index
    %7 = memref.load %arg4[%c2] : memref<13xf32, #tpu.memory_space<smem>>
    %c3 = arith.constant 3 : index
    %8 = memref.load %arg4[%c3] : memref<13xf32, #tpu.memory_space<smem>>
    %c4 = arith.constant 4 : index
    %9 = memref.load %arg4[%c4] : memref<13xf32, #tpu.memory_space<smem>>
    %c5 = arith.constant 5 : index
    %10 = memref.load %arg4[%c5] : memref<13xf32, #tpu.memory_space<smem>>
    %c6 = arith.constant 6 : index
    %11 = memref.load %arg4[%c6] : memref<13xf32, #tpu.memory_space<smem>>
    %c7 = arith.constant 7 : index
    %12 = memref.load %arg4[%c7] : memref<13xf32, #tpu.memory_space<smem>>
    %c8 = arith.constant 8 : index
    %13 = memref.load %arg4[%c8] : memref<13xf32, #tpu.memory_space<smem>>
    %c9 = arith.constant 9 : index
    %14 = memref.load %arg4[%c9] : memref<13xf32, #tpu.memory_space<smem>>
    %c10 = arith.constant 10 : index
    %15 = memref.load %arg4[%c10] : memref<13xf32, #tpu.memory_space<smem>>
    %c11 = arith.constant 11 : index
    %16 = memref.load %arg4[%c11] : memref<13xf32, #tpu.memory_space<smem>>
    %c12 = arith.constant 12 : index
    %17 = memref.load %arg4[%c12] : memref<13xf32, #tpu.memory_space<smem>>
    %c0_1 = arith.constant 0 : index
    %18 = memref.load %arg5[%c0_1] : memref<1xf32, #tpu.memory_space<smem>>
    %c0_2 = arith.constant 0 : index
    %19 = memref.load %arg6[%c0_2] : memref<1xi32, #tpu.memory_space<smem>>
    %c0_i32_3 = arith.constant 0 : i32
    %20 = arith.cmpi sge, %1, %c0_i32_3 : i32
    %21 = arith.extui %20 : i1 to i32
    %c0_i32_4 = arith.constant 0 : i32
    %22 = arith.cmpi ne, %21, %c0_i32_4 : i32
    scf.if %22 {
      %c0_7 = arith.constant 0 : index
      %c0_8 = arith.constant 0 : index
      %c0_9 = arith.constant 0 : index
      %26 = vector.load %arg2[%c0_7, %c0_8, %c0_9] : memref<13x8x1xf32, #tpu.memory_space<vmem>>, vector<1x8x1xf32>
      %27 = vector.shape_cast %26 : vector<1x8x1xf32> to vector<8x1xf32>
      %28 = vector.broadcast %5 : f32 to vector<8x1xf32>
      %29 = arith.mulf %27, %28 : vector<8x1xf32>
      %c1_10 = arith.constant 1 : index
      %c0_11 = arith.constant 0 : index
      %c0_12 = arith.constant 0 : index
      %30 = vector.load %arg2[%c1_10, %c0_11, %c0_12] : memref<13x8x1xf32, #tpu.memory_space<vmem>>, vector<1x8x1xf32>
      %31 = vector.shape_cast %30 : vector<1x8x1xf32> to vector<8x1xf32>
      %32 = vector.broadcast %6 : f32 to vector<8x1xf32>
      %33 = arith.mulf %31, %32 : vector<8x1xf32>
      %34 = arith.addf %29, %33 : vector<8x1xf32>
      %c2_13 = arith.constant 2 : index
      %c0_14 = arith.constant 0 : index
      %c0_15 = arith.constant 0 : index
      %35 = vector.load %arg2[%c2_13, %c0_14, %c0_15] : memref<13x8x1xf32, #tpu.memory_space<vmem>>, vector<1x8x1xf32>
      %36 = vector.shape_cast %35 : vector<1x8x1xf32> to vector<8x1xf32>
      %37 = vector.broadcast %7 : f32 to vector<8x1xf32>
      %38 = arith.mulf %36, %37 : vector<8x1xf32>
      %39 = arith.addf %34, %38 : vector<8x1xf32>
      %c3_16 = arith.constant 3 : index
      %c0_17 = arith.constant 0 : index
      %c0_18 = arith.constant 0 : index
      %40 = vector.load %arg2[%c3_16, %c0_17, %c0_18] : memref<13x8x1xf32, #tpu.memory_space<vmem>>, vector<1x8x1xf32>
      %41 = vector.shape_cast %40 : vector<1x8x1xf32> to vector<8x1xf32>
      %42 = vector.broadcast %8 : f32 to vector<8x1xf32>
      %43 = arith.mulf %41, %42 : vector<8x1xf32>
      %44 = arith.addf %39, %43 : vector<8x1xf32>
      %c4_19 = arith.constant 4 : index
      %c0_20 = arith.constant 0 : index
      %c0_21 = arith.constant 0 : index
      %45 = vector.load %arg2[%c4_19, %c0_20, %c0_21] : memref<13x8x1xf32, #tpu.memory_space<vmem>>, vector<1x8x1xf32>
      %46 = vector.shape_cast %45 : vector<1x8x1xf32> to vector<8x1xf32>
      %47 = vector.broadcast %9 : f32 to vector<8x1xf32>
      %48 = arith.mulf %46, %47 : vector<8x1xf32>
      %49 = arith.addf %44, %48 : vector<8x1xf32>
      %c5_22 = arith.constant 5 : index
      %c0_23 = arith.constant 0 : index
      %c0_24 = arith.constant 0 : index
      %50 = vector.load %arg2[%c5_22, %c0_23, %c0_24] : memref<13x8x1xf32, #tpu.memory_space<vmem>>, vector<1x8x1xf32>
      %51 = vector.shape_cast %50 : vector<1x8x1xf32> to vector<8x1xf32>
      %52 = vector.broadcast %10 : f32 to vector<8x1xf32>
      %53 = arith.mulf %51, %52 : vector<8x1xf32>
      %54 = arith.addf %49, %53 : vector<8x1xf32>
      %c6_25 = arith.constant 6 : index
      %c0_26 = arith.constant 0 : index
      %c0_27 = arith.constant 0 : index
      %55 = vector.load %arg2[%c6_25, %c0_26, %c0_27] : memref<13x8x1xf32, #tpu.memory_space<vmem>>, vector<1x8x1xf32>
      %56 = vector.shape_cast %55 : vector<1x8x1xf32> to vector<8x1xf32>
      %57 = vector.broadcast %11 : f32 to vector<8x1xf32>
      %58 = arith.mulf %56, %57 : vector<8x1xf32>
      %59 = arith.addf %54, %58 : vector<8x1xf32>
      %c7_28 = arith.constant 7 : index
      %c0_29 = arith.constant 0 : index
      %c0_30 = arith.constant 0 : index
      %60 = vector.load %arg2[%c7_28, %c0_29, %c0_30] : memref<13x8x1xf32, #tpu.memory_space<vmem>>, vector<1x8x1xf32>
      %61 = vector.shape_cast %60 : vector<1x8x1xf32> to vector<8x1xf32>
      %62 = vector.broadcast %12 : f32 to vector<8x1xf32>
      %63 = arith.mulf %61, %62 : vector<8x1xf32>
      %64 = arith.addf %59, %63 : vector<8x1xf32>
      %c8_31 = arith.constant 8 : index
      %c0_32 = arith.constant 0 : index
      %c0_33 = arith.constant 0 : index
      %65 = vector.load %arg2[%c8_31, %c0_32, %c0_33] : memref<13x8x1xf32, #tpu.memory_space<vmem>>, vector<1x8x1xf32>
      %66 = vector.shape_cast %65 : vector<1x8x1xf32> to vector<8x1xf32>
      %67 = vector.broadcast %13 : f32 to vector<8x1xf32>
      %68 = arith.mulf %66, %67 : vector<8x1xf32>
      %69 = arith.addf %64, %68 : vector<8x1xf32>
      %c9_34 = arith.constant 9 : index
      %c0_35 = arith.constant 0 : index
      %c0_36 = arith.constant 0 : index
      %70 = vector.load %arg2[%c9_34, %c0_35, %c0_36] : memref<13x8x1xf32, #tpu.memory_space<vmem>>, vector<1x8x1xf32>
      %71 = vector.shape_cast %70 : vector<1x8x1xf32> to vector<8x1xf32>
      %72 = vector.broadcast %14 : f32 to vector<8x1xf32>
      %73 = arith.mulf %71, %72 : vector<8x1xf32>
      %74 = arith.addf %69, %73 : vector<8x1xf32>
      %c10_37 = arith.constant 10 : index
      %c0_38 = arith.constant 0 : index
      %c0_39 = arith.constant 0 : index
      %75 = vector.load %arg2[%c10_37, %c0_38, %c0_39] : memref<13x8x1xf32, #tpu.memory_space<vmem>>, vector<1x8x1xf32>
      %76 = vector.shape_cast %75 : vector<1x8x1xf32> to vector<8x1xf32>
      %77 = vector.broadcast %15 : f32 to vector<8x1xf32>
      %78 = arith.mulf %76, %77 : vector<8x1xf32>
      %79 = arith.addf %74, %78 : vector<8x1xf32>
      %c11_40 = arith.constant 11 : index
      %c0_41 = arith.constant 0 : index
      %c0_42 = arith.constant 0 : index
      %80 = vector.load %arg2[%c11_40, %c0_41, %c0_42] : memref<13x8x1xf32, #tpu.memory_space<vmem>>, vector<1x8x1xf32>
      %81 = vector.shape_cast %80 : vector<1x8x1xf32> to vector<8x1xf32>
      %82 = vector.broadcast %16 : f32 to vector<8x1xf32>
      %83 = arith.mulf %81, %82 : vector<8x1xf32>
      %84 = arith.addf %79, %83 : vector<8x1xf32>
      %c12_43 = arith.constant 12 : index
      %c0_44 = arith.constant 0 : index
      %c0_45 = arith.constant 0 : index
      %85 = vector.load %arg2[%c12_43, %c0_44, %c0_45] : memref<13x8x1xf32, #tpu.memory_space<vmem>>, vector<1x8x1xf32>
      %86 = vector.shape_cast %85 : vector<1x8x1xf32> to vector<8x1xf32>
      %87 = vector.broadcast %17 : f32 to vector<8x1xf32>
      %88 = arith.mulf %86, %87 : vector<8x1xf32>
      %89 = arith.addf %84, %88 : vector<8x1xf32>
      %90 = vector.broadcast %18 : f32 to vector<8x1xf32>
      %91 = arith.addf %89, %90 : vector<8x1xf32>
      %92 = math.tanh %91 : vector<8x1xf32>
      %c0_46 = arith.constant 0 : index
      %c0_47 = arith.constant 0 : index
      %93 = vector.load %arg3[%c0_46, %c0_47] : memref<8x1xf32, #tpu.memory_space<vmem>>, vector<8x1xf32>
      %94 = arith.subf %92, %93 : vector<8x1xf32>
      %95 = arith.mulf %94, %94 : vector<8x1xf32>
      %96 = tpu.iota {dimensions = array<i32: 1>} : vector<8x1xi32>
      %97 = tpu.iota {dimensions = array<i32: 0>} : vector<8x1xi32>
      %c1_i32_48 = arith.constant 1 : i32
      %98 = arith.muli %1, %c1_i32_48 : i32
      %c0_i32_49 = arith.constant 0 : i32
      %99 = arith.addi %98, %c0_i32_49 : i32
      %100 = vector.broadcast %99 : i32 to vector<8x1xi32>
      %101 = arith.addi %100, %96 : vector<8x1xi32>
      %c1_i32_50 = arith.constant 1 : i32
      %102 = vector.broadcast %c1_i32_50 : i32 to vector<8x1xi32>
      %103 = arith.muli %97, %102 : vector<8x1xi32>
      %104 = arith.addi %103, %101 : vector<8x1xi32>
      %c1_i32_51 = arith.constant 1 : i32
      %105 = vector.broadcast %c1_i32_51 : i32 to vector<8x1xi32>
      %106 = arith.cmpi slt, %101, %105 : vector<8x1xi32>
      %107 = vector.broadcast %19 : i32 to vector<8x1xi32>
      %108 = arith.cmpi slt, %104, %107 : vector<8x1xi32>
      %109 = arith.andi %106, %108 : vector<8x1xi1>
      %c1_i32_52 = arith.constant 1 : i32
      %110 = arith.cmpi slt, %1, %c1_i32_52 : i32
      %111 = vector.broadcast %110 : i1 to vector<8x1xi1>
      %112 = arith.andi %109, %111 : vector<8x1xi1>
      %cst = arith.constant 0.000000e+00 : f32
      %113 = vector.broadcast %cst : f32 to vector<8x1xf32>
      %114 = arith.select %112, %95, %113 : vector<8x1xi1>, vector<8x1xf32>
      %c0_53 = arith.constant 0 : index
      %c0_54 = arith.constant 0 : index
      %c0_55 = arith.constant 0 : index
      %115 = vector.load %arg7[%c0_53, %c0_54, %c0_55] : memref<1x8x1xf32, #tpu.memory_space<vmem>>, vector<1x8x1xf32>
      %116 = vector.shape_cast %115 : vector<1x8x1xf32> to vector<8x1xf32>
      %117 = arith.addf %116, %114 : vector<8x1xf32>
      %c0_56 = arith.constant 0 : index
      %c0_57 = arith.constant 0 : index
      %c0_58 = arith.constant 0 : index
      %118 = vector.load %arg7[%c0_56, %c0_57, %c0_58] : memref<1x8x1xf32, #tpu.memory_space<vmem>>, vector<1x8x1xf32>
      %119 = vector.shape_cast %118 : vector<1x8x1xf32> to vector<8x1xf32>
      %120 = vector.shape_cast %117 : vector<8x1xf32> to vector<1x8x1xf32>
      tpu.vector_store %arg7[%c0_56, %c0_57, %c0_58], %120 {strides = array<i32>} : memref<1x8x1xf32, #tpu.memory_space<vmem>>, vector<1x8x1xf32>,
    } else {
    }
    %c0_i32_5 = arith.constant 0 : i32
    %23 = arith.cmpi slt, %1, %c0_i32_5 : i32
    %24 = arith.extui %23 : i1 to i32
    %c0_i32_6 = arith.constant 0 : i32
    %25 = arith.cmpi ne, %24, %c0_i32_6 : i32
    scf.if %25 {
      %c0_7 = arith.constant 0 : index
      %c0_8 = arith.constant 0 : index
      %c0_9 = arith.constant 0 : index
      %26 = vector.load %arg2[%c0_7, %c0_8, %c0_9] : memref<13x8x1xf32, #tpu.memory_space<vmem>>, vector<1x8x1xf32>
      %27 = vector.shape_cast %26 : vector<1x8x1xf32> to vector<8x1xf32>
      %28 = vector.broadcast %5 : f32 to vector<8x1xf32>
      %29 = arith.mulf %27, %28 : vector<8x1xf32>
      %c1_10 = arith.constant 1 : index
      %c0_11 = arith.constant 0 : index
      %c0_12 = arith.constant 0 : index
      %30 = vector.load %arg2[%c1_10, %c0_11, %c0_12] : memref<13x8x1xf32, #tpu.memory_space<vmem>>, vector<1x8x1xf32>
      %31 = vector.shape_cast %30 : vector<1x8x1xf32> to vector<8x1xf32>
      %32 = vector.broadcast %6 : f32 to vector<8x1xf32>
      %33 = arith.mulf %31, %32 : vector<8x1xf32>
      %34 = arith.addf %29, %33 : vector<8x1xf32>
      %c2_13 = arith.constant 2 : index
      %c0_14 = arith.constant 0 : index
      %c0_15 = arith.constant 0 : index
      %35 = vector.load %arg2[%c2_13, %c0_14, %c0_15] : memref<13x8x1xf32, #tpu.memory_space<vmem>>, vector<1x8x1xf32>
      %36 = vector.shape_cast %35 : vector<1x8x1xf32> to vector<8x1xf32>
      %37 = vector.broadcast %7 : f32 to vector<8x1xf32>
      %38 = arith.mulf %36, %37 : vector<8x1xf32>
      %39 = arith.addf %34, %38 : vector<8x1xf32>
      %c3_16 = arith.constant 3 : index
      %c0_17 = arith.constant 0 : index
      %c0_18 = arith.constant 0 : index
      %40 = vector.load %arg2[%c3_16, %c0_17, %c0_18] : memref<13x8x1xf32, #tpu.memory_space<vmem>>, vector<1x8x1xf32>
      %41 = vector.shape_cast %40 : vector<1x8x1xf32> to vector<8x1xf32>
      %42 = vector.broadcast %8 : f32 to vector<8x1xf32>
      %43 = arith.mulf %41, %42 : vector<8x1xf32>
      %44 = arith.addf %39, %43 : vector<8x1xf32>
      %c4_19 = arith.constant 4 : index
      %c0_20 = arith.constant 0 : index
      %c0_21 = arith.constant 0 : index
      %45 = vector.load %arg2[%c4_19, %c0_20, %c0_21] : memref<13x8x1xf32, #tpu.memory_space<vmem>>, vector<1x8x1xf32>
      %46 = vector.shape_cast %45 : vector<1x8x1xf32> to vector<8x1xf32>
      %47 = vector.broadcast %9 : f32 to vector<8x1xf32>
      %48 = arith.mulf %46, %47 : vector<8x1xf32>
      %49 = arith.addf %44, %48 : vector<8x1xf32>
      %c5_22 = arith.constant 5 : index
      %c0_23 = arith.constant 0 : index
      %c0_24 = arith.constant 0 : index
      %50 = vector.load %arg2[%c5_22, %c0_23, %c0_24] : memref<13x8x1xf32, #tpu.memory_space<vmem>>, vector<1x8x1xf32>
      %51 = vector.shape_cast %50 : vector<1x8x1xf32> to vector<8x1xf32>
      %52 = vector.broadcast %10 : f32 to vector<8x1xf32>
      %53 = arith.mulf %51, %52 : vector<8x1xf32>
      %54 = arith.addf %49, %53 : vector<8x1xf32>
      %c6_25 = arith.constant 6 : index
      %c0_26 = arith.constant 0 : index
      %c0_27 = arith.constant 0 : index
      %55 = vector.load %arg2[%c6_25, %c0_26, %c0_27] : memref<13x8x1xf32, #tpu.memory_space<vmem>>, vector<1x8x1xf32>
      %56 = vector.shape_cast %55 : vector<1x8x1xf32> to vector<8x1xf32>
      %57 = vector.broadcast %11 : f32 to vector<8x1xf32>
      %58 = arith.mulf %56, %57 : vector<8x1xf32>
      %59 = arith.addf %54, %58 : vector<8x1xf32>
      %c7_28 = arith.constant 7 : index
      %c0_29 = arith.constant 0 : index
      %c0_30 = arith.constant 0 : index
      %60 = vector.load %arg2[%c7_28, %c0_29, %c0_30] : memref<13x8x1xf32, #tpu.memory_space<vmem>>, vector<1x8x1xf32>
      %61 = vector.shape_cast %60 : vector<1x8x1xf32> to vector<8x1xf32>
      %62 = vector.broadcast %12 : f32 to vector<8x1xf32>
      %63 = arith.mulf %61, %62 : vector<8x1xf32>
      %64 = arith.addf %59, %63 : vector<8x1xf32>
      %c8_31 = arith.constant 8 : index
      %c0_32 = arith.constant 0 : index
      %c0_33 = arith.constant 0 : index
      %65 = vector.load %arg2[%c8_31, %c0_32, %c0_33] : memref<13x8x1xf32, #tpu.memory_space<vmem>>, vector<1x8x1xf32>
      %66 = vector.shape_cast %65 : vector<1x8x1xf32> to vector<8x1xf32>
      %67 = vector.broadcast %13 : f32 to vector<8x1xf32>
      %68 = arith.mulf %66, %67 : vector<8x1xf32>
      %69 = arith.addf %64, %68 : vector<8x1xf32>
      %c9_34 = arith.constant 9 : index
      %c0_35 = arith.constant 0 : index
      %c0_36 = arith.constant 0 : index
      %70 = vector.load %arg2[%c9_34, %c0_35, %c0_36] : memref<13x8x1xf32, #tpu.memory_space<vmem>>, vector<1x8x1xf32>
      %71 = vector.shape_cast %70 : vector<1x8x1xf32> to vector<8x1xf32>
      %72 = vector.broadcast %14 : f32 to vector<8x1xf32>
      %73 = arith.mulf %71, %72 : vector<8x1xf32>
      %74 = arith.addf %69, %73 : vector<8x1xf32>
      %c10_37 = arith.constant 10 : index
      %c0_38 = arith.constant 0 : index
      %c0_39 = arith.constant 0 : index
      %75 = vector.load %arg2[%c10_37, %c0_38, %c0_39] : memref<13x8x1xf32, #tpu.memory_space<vmem>>, vector<1x8x1xf32>
      %76 = vector.shape_cast %75 : vector<1x8x1xf32> to vector<8x1xf32>
      %77 = vector.broadcast %15 : f32 to vector<8x1xf32>
      %78 = arith.mulf %76, %77 : vector<8x1xf32>
      %79 = arith.addf %74, %78 : vector<8x1xf32>
      %c11_40 = arith.constant 11 : index
      %c0_41 = arith.constant 0 : index
      %c0_42 = arith.constant 0 : index
      %80 = vector.load %arg2[%c11_40, %c0_41, %c0_42] : memref<13x8x1xf32, #tpu.memory_space<vmem>>, vector<1x8x1xf32>
      %81 = vector.shape_cast %80 : vector<1x8x1xf32> to vector<8x1xf32>
      %82 = vector.broadcast %16 : f32 to vector<8x1xf32>
      %83 = arith.mulf %81, %82 : vector<8x1xf32>
      %84 = arith.addf %79, %83 : vector<8x1xf32>
      %c12_43 = arith.constant 12 : index
      %c0_44 = arith.constant 0 : index
      %c0_45 = arith.constant 0 : index
      %85 = vector.load %arg2[%c12_43, %c0_44, %c0_45] : memref<13x8x1xf32, #tpu.memory_space<vmem>>, vector<1x8x1xf32>
      %86 = vector.shape_cast %85 : vector<1x8x1xf32> to vector<8x1xf32>
      %87 = vector.broadcast %17 : f32 to vector<8x1xf32>
      %88 = arith.mulf %86, %87 : vector<8x1xf32>
      %89 = arith.addf %84, %88 : vector<8x1xf32>
      %90 = vector.broadcast %18 : f32 to vector<8x1xf32>
      %91 = arith.addf %89, %90 : vector<8x1xf32>
      %92 = math.tanh %91 : vector<8x1xf32>
      %c0_46 = arith.constant 0 : index
      %c0_47 = arith.constant 0 : index
      %93 = vector.load %arg3[%c0_46, %c0_47] : memref<8x1xf32, #tpu.memory_space<vmem>>, vector<8x1xf32>
      %94 = arith.subf %92, %93 : vector<8x1xf32>
      %95 = arith.mulf %94, %94 : vector<8x1xf32>
      %c0_48 = arith.constant 0 : index
      %c0_49 = arith.constant 0 : index
      %c0_50 = arith.constant 0 : index
      %96 = vector.load %arg7[%c0_48, %c0_49, %c0_50] : memref<1x8x1xf32, #tpu.memory_space<vmem>>, vector<1x8x1xf32>
      %97 = vector.shape_cast %96 : vector<1x8x1xf32> to vector<8x1xf32>
      %98 = arith.addf %97, %95 : vector<8x1xf32>
      %c0_51 = arith.constant 0 : index
      %c0_52 = arith.constant 0 : index
      %c0_53 = arith.constant 0 : index
      %99 = vector.load %arg7[%c0_51, %c0_52, %c0_53] : memref<1x8x1xf32, #tpu.memory_space<vmem>>, vector<1x8x1xf32>
      %100 = vector.shape_cast %99 : vector<1x8x1xf32> to vector<8x1xf32>
      %101 = vector.shape_cast %98 : vector<8x1xf32> to vector<1x8x1xf32>
      tpu.vector_store %arg7[%c0_51, %c0_52, %c0_53], %101 {strides = array<i32>} : memref<1x8x1xf32, #tpu.memory_space<vmem>>, vector<1x8x1xf32>,
    } else {
    }
    return
  }
  func.func @transform_0(%arg0: i32, %arg1: i32) -> (i32, i32, i32) {
    %c1_i32 = arith.constant 1 : i32
    %0 = arith.muli %arg0, %c1_i32 : i32
    %1 = arith.addi %0, %arg1 : i32
    %c0_i32 = arith.constant 0 : i32
    %2 = arith.minsi %1, %c0_i32 : i32
    %c0_i32_0 = arith.constant 0 : i32
    %c0_i32_1 = arith.constant 0 : i32
    %c0_i32_2 = arith.constant 0 : i32
    return %c0_i32_0, %c0_i32_1, %2 : i32, i32, i32
  }
  func.func @transform_1(%arg0: i32, %arg1: i32) -> (i32, i32) {
    %c1_i32 = arith.constant 1 : i32
    %0 = arith.muli %arg0, %c1_i32 : i32
    %1 = arith.addi %0, %arg1 : i32
    %c0_i32 = arith.constant 0 : i32
    %2 = arith.minsi %1, %c0_i32 : i32
    %c0_i32_0 = arith.constant 0 : i32
    %c0_i32_1 = arith.constant 0 : i32
    return %c0_i32_0, %2 : i32, i32
  }
  func.func @transform_2(%arg0: i32, %arg1: i32) -> i32 {
    %c0_i32 = arith.constant 0 : i32
    %c0_i32_0 = arith.constant 0 : i32
    return %c0_i32 : i32
  }
  func.func @transform_3(%arg0: i32, %arg1: i32) -> i32 {
    %c0_i32 = arith.constant 0 : i32
    %c0_i32_0 = arith.constant 0 : i32
    return %c0_i32 : i32
  }
  func.func @transform_4(%arg0: i32, %arg1: i32) -> i32 {
    %c0_i32 = arith.constant 0 : i32
    %c0_i32_0 = arith.constant 0 : i32
    return %c0_i32 : i32
  }
  func.func @transform_5(%arg0: i32, %arg1: i32) -> (i32, i32, i32) {
    %c0_i32 = arith.constant 0 : i32
    %c0_i32_0 = arith.constant 0 : i32
    %c0_i32_1 = arith.constant 0 : i32
    return %arg0, %c0_i32, %c0_i32_0 : i32, i32, i32
  }
}

</mosaic_0001>

<llo_original>
// kernel: reseau1_forward.1
$region0: #{reseau1_forward.1}
  #allocation0 [shape = 'u32[]', space=smem, size = 0x4, offset = 0x4, fixed_abs, tag = 'smem constant byte address 0x4 - core index']
  #allocation1 [shape = 'u32[72,128]{1,0:T(1,128)}', space=vmem, size = 0x9000, scoped, tag = 'internal scratch']
  #allocation2 [shape = 'f32[1]{0:T(128)S(6)}', space=smem, size = 0x200, scoped, tag = 'scoped memory for reseau1_forward.1']
  #allocation3 [shape = 's32[1]{0:T(128)S(6)}', space=smem, size = 0x200, scoped, tag = 'scoped memory for reseau1_forward.1']
  %s0 = inlined_call_operand.vmem [shape: f32[13,8,1], index: 0, kind: input, shape index: {}]
  %s1 = inlined_call_operand.vmem [shape: f32[8,1], index: 1, kind: input, shape index: {}]
  %s2 = inlined_call_operand.vmem [shape: f32[13], index: 2, kind: input, shape index: {}]
  %s3 = inlined_call_operand.<no memory space> [shape: f32[1], index: 3, kind: input, shape index: {}]
  %s4 = inlined_call_operand.<no memory space> [shape: s32[1], index: 4, kind: input, shape index: {}]
  %s5 = inlined_call_operand.vmem [shape: f32[1,8,1], index: 5, kind: output, shape index: {}]
  %s6 = sld [smem:[#allocation0]]
  $region46: #{reseau1_forward.1} parent=0
    _
  %s8 = ssub.s32 1, %s6
  %s9 = scalar_select 0, %s8, %s6
  %10 = sst [smem:[#allocation2]] %s3
  %11 = sst [smem:[#allocation3]] %s4
  $region1: #{reseau1_forward.1} parent=0
    #allocation4 [shape = 'u8[512]{0}', space=smem, size = 0x200, scoped, tag = 'input window, operand 2, single buffered']
    #allocation5 [shape = 's32[1]{0}', space=sflag, size = 0x4, scoped, tag = 'scoped memory for reseau1_forward.1']
    %12 = vsyncpa [#allocation5], 0
    // Predicated region
    $region2: #{reseau1_forward.1} parent=1 // pred_check
      _
    $region3: #{reseau1_forward.1} parent=1 // pred_check_branch
      %14 = sbr.rel (0) target = $region5
    $region4: #{reseau1_forward.1} parent=1 // pred_region
      %s15 = sadd.s32 0, 0
      %p16 = scmp.lt.s32.totalorder %s15, 0
      %s17 = scalar_select %p16, %s15, 0
      %p18 = scmp.lt.s32.totalorder %s17, 0
      %s19 = scalar_select %p18, %s17, 0
      %s20 = smul.addr %s19, 8
      %s21 = scalar_lea.vmem %s0, %s20
      %s22 = sadd.s32 0, 0
      %p23 = scmp.lt.s32.totalorder %s22, 0
      %s24 = scalar_select %p23, %s22, 0
    $region5: #{reseau1_forward.1} parent=1 // pred_fallthru
      _
    // Predicated region
    $region6: #{reseau1_forward.1} parent=1 // pred_check
      _
    $region7: #{reseau1_forward.1} parent=1 // pred_check_branch
      %26 = sbr.rel (0) target = $region9
    $region8: #{reseau1_forward.1} parent=1 // pred_region
      %s27 = sadd.s32 0, 0
      %p28 = scmp.lt.s32.totalorder %s27, 0
      %s29 = scalar_select %p28, %s27, 0
      %p30 = scmp.lt.s32.totalorder %s29, 0
      %s31 = scalar_select %p30, %s29, 0
      %s32 = smul.addr %s31, 8
      %s33 = scalar_lea.vmem %s1, %s32
      %s34 = sadd.s32 0, 0
      %p35 = scmp.lt.s32.totalorder %s34, 0
      %s36 = scalar_select %p35, %s34, 0
    $region9: #{reseau1_forward.1} parent=1 // pred_fallthru
      _
    // Predicated region
    $region10: #{reseau1_forward.1} parent=1 // pred_check
      _
    $region11: #{reseau1_forward.1} parent=1 // pred_check_branch
      %38 = sbr.rel (0) target = $region13
    $region12: #{reseau1_forward.1} parent=1 // pred_region
      %40 = vsyncadd [#allocation5], 0
      %s42 = sshll.u32 %s2, 4
      %s43 = int_to_ptr.vmem [resolvable:$true] %s42
      %45 = dma.vmem_to_smem %s43, 16, [#allocation4], [#allocation5]
    $region13: #{reseau1_forward.1} parent=1 // pred_fallthru
      _
    // Predicated region
    $region14: #{reseau1_forward.1} parent=1 // pred_check
      _
    $region15: #{reseau1_forward.1} parent=1 // pred_check_branch
      %47 = sbr.rel (0) target = $region17
    $region16: #{reseau1_forward.1} parent=1 // pred_region
      _
    $region17: #{reseau1_forward.1} parent=1 // pred_fallthru
      _
    // Predicated region
    $region18: #{reseau1_forward.1} parent=1 // pred_check
      _
    $region19: #{reseau1_forward.1} parent=1 // pred_check_branch
      %49 = sbr.rel (0) target = $region21
    $region20: #{reseau1_forward.1} parent=1 // pred_region
      _
    $region21: #{reseau1_forward.1} parent=1 // pred_fallthru
      _
    // Predicated region
    $region22: #{reseau1_forward.1} parent=1 // pred_check
      _
    $region23: #{reseau1_forward.1} parent=1 // pred_check_branch
      %51 = sbr.rel (0) target = $region25
    $region24: #{reseau1_forward.1} parent=1 // pred_region
      %53 = dma.done [#allocation5], 16
    $region25: #{reseau1_forward.1} parent=1 // pred_fallthru
      _
    %54 = sfence
    %s55 = sadd.s32 0, 0
    %p56 = scmp.lt.s32.totalorder %s55, 0
    %s57 = scalar_select %p56, %s55, 0
    %p58 = scmp.lt.s32.totalorder %s57, 0
    %s59 = scalar_select %p58, %s57, 0
    %s60 = smul.addr %s59, 8
    %s61 = scalar_lea.vmem %s0, %s60
    %s62 = sadd.s32 0, 0
    %p63 = scmp.lt.s32.totalorder %s62, 0
    %s64 = scalar_select %p63, %s62, 0
    %p65 = scmp.lt.s32.totalorder %s64, 0
    %s66 = scalar_select %p65, %s64, 0
    %s67 = smul.addr %s66, 8
    %s68 = scalar_lea.vmem %s1, %s67
    %s69 = sadd.s32 0, 0
    %p70 = scmp.lt.s32.totalorder %s69, 0
    %s71 = scalar_select %p70, %s69, 0
    %p72 = scmp.lt.s32.totalorder %s71, 0
    %s73 = scalar_select %p72, %s71, 0
    %s74 = smul.addr %s73, 8
    %s75 = scalar_lea.vmem %s0, %s74
    %s76 = sadd.s32 0, 0
    %p77 = scmp.lt.s32.totalorder %s76, 0
    %s78 = scalar_select %p77, %s76, 0
    %s79 = sadd.s32 0, 0
    %p80 = scmp.lt.s32.totalorder %s79, 0
    %s81 = scalar_select %p80, %s79, 0
    %p82 = scmp.lt.s32.totalorder %s81, 0
    %s83 = scalar_select %p82, %s81, 0
    %s84 = smul.addr %s83, 8
    %s85 = scalar_lea.vmem %s1, %s84
    %s86 = sadd.s32 0, 0
    %p87 = scmp.lt.s32.totalorder %s86, 0
    %s88 = scalar_select %p87, %s86, 0
    %s89 = sadd.s32 0, 0
    %p90 = scmp.eq.s32.totalorder 0, 0
    // Predicated region
    $region26: #{reseau1_forward.1} parent=1 // pred_check
      %p91 = pneg %p90
    $region27: #{reseau1_forward.1} parent=1 // pred_check_branch
      %93 = sbr.rel (%p91) target = $region29
    $region28: #{reseau1_forward.1} parent=1 // pred_region
      %vm94 = vcmask 7168
      %95 = vst.msk [vmem:[%s5] sm:$0xff] %vm94, 0.0
    $region29: #{reseau1_forward.1} parent=1 // pred_fallthru
      _
    %s96 = sld [smem:[#allocation4]]
    %s97 = sld [smem:[#allocation4 + $0x1]]
    %s98 = sld [smem:[#allocation4 + $0x2]]
    %s99 = sld [smem:[#allocation4 + $0x3]]
    %s100 = sld [smem:[#allocation4 + $0x4]]
    %s101 = sld [smem:[#allocation4 + $0x5]]
    %s102 = sld [smem:[#allocation4 + $0x6]]
    %s103 = sld [smem:[#allocation4 + $0x7]]
    %s104 = sld [smem:[#allocation4 + $0x8]]
    %s105 = sld [smem:[#allocation4 + $0x9]]
    %s106 = sld [smem:[#allocation4 + $0xa]]
    %s107 = sld [smem:[#allocation4 + $0xb]]
    %s108 = sld [smem:[#allocation4 + $0xc]]
    %s109 = sld [smem:[#allocation2]]
    %s110 = sld [smem:[#allocation3]]
    %p111 = scmp.ge.s32.totalorder %s89, 0
    // Predicated region
    $region30: #{reseau1_forward.1} parent=1 // pred_check
      %p112 = pneg %p111
    $region31: #{reseau1_forward.1} parent=1 // pred_check_branch
      %114 = sbr.rel (%p112) target = $region33
    $region32: #{reseau1_forward.1} parent=1 // pred_region
      %v115 = vld [vmem:[%s75] sm:$0xff]
      %v116 = vstv %s96
      %v117 = vmul.f32 %v115, %v116
      %s118 = scalar_lea.vmem %s75, 8
      %v119 = vld [vmem:[%s118] sm:$0xff]
      %v120 = vstv %s97
      %v121 = vmul.f32 %v119, %v120
      %v122 = vadd.f32 %v117, %v121
      %s123 = scalar_lea.vmem %s75, 16
      %v124 = vld [vmem:[%s123] sm:$0xff]
      %v125 = vstv %s98
      %v126 = vmul.f32 %v124, %v125
      %v127 = vadd.f32 %v122, %v126
      %s128 = scalar_lea.vmem %s75, 24
      %v129 = vld [vmem:[%s128] sm:$0xff]
      %v130 = vstv %s99
      %v131 = vmul.f32 %v129, %v130
      %v132 = vadd.f32 %v127, %v131
      %s133 = scalar_lea.vmem %s75, 32
      %v134 = vld [vmem:[%s133] sm:$0xff]
      %v135 = vstv %s100
      %v136 = vmul.f32 %v134, %v135
      %v137 = vadd.f32 %v132, %v136
      %s138 = scalar_lea.vmem %s75, 40
      %v139 = vld [vmem:[%s138] sm:$0xff]
      %v140 = vstv %s101
      %v141 = vmul.f32 %v139, %v140
      %v142 = vadd.f32 %v137, %v141
      %s143 = scalar_lea.vmem %s75, 48
      %v144 = vld [vmem:[%s143] sm:$0xff]
      %v145 = vstv %s102
      %v146 = vmul.f32 %v144, %v145
      %v147 = vadd.f32 %v142, %v146
      %s148 = scalar_lea.vmem %s75, 56
      %v149 = vld [vmem:[%s148] sm:$0xff]
      %v150 = vstv %s103
      %v151 = vmul.f32 %v149, %v150
      %v152 = vadd.f32 %v147, %v151
      %s153 = scalar_lea.vmem %s75, 64
      %v154 = vld [vmem:[%s153] sm:$0xff]
      %v155 = vstv %s104
      %v156 = vmul.f32 %v154, %v155
      %v157 = vadd.f32 %v152, %v156
      %s158 = scalar_lea.vmem %s75, 72
      %v159 = vld [vmem:[%s158] sm:$0xff]
      %v160 = vstv %s105
      %v161 = vmul.f32 %v159, %v160
      %v162 = vadd.f32 %v157, %v161
      %s163 = scalar_lea.vmem %s75, 80
      %v164 = vld [vmem:[%s163] sm:$0xff]
      %v165 = vstv %s106
      %v166 = vmul.f32 %v164, %v165
      %v167 = vadd.f32 %v162, %v166
      %s168 = scalar_lea.vmem %s75, 88
      %v169 = vld [vmem:[%s168] sm:$0xff]
      %v170 = vstv %s107
      %v171 = vmul.f32 %v169, %v170
      %v172 = vadd.f32 %v167, %v171
      %s173 = scalar_lea.vmem %s75, 96
      %v174 = vld [vmem:[%s173] sm:$0xff]
      %v175 = vstv %s108
      %v176 = vmul.f32 %v174, %v175
      %v177 = vadd.f32 %v172, %v176
      %v178 = vstv %s109
      %v179 = vadd.f32 %v177, %v178
      %v180 = vtanh.pop %v179
      %v181 = vld [vmem:[%s85] sm:$0xff]
      %v182 = vsub.f32 %v180, %v181
      %v183 = vmul.f32 %v182, %v182
      %v184 = vlaneseq
      %v185 = vand.u32 %v184, 127
      %v186 = vlaneseq
      %v187 = vshrl.u32 %v186, 7
      %v188 = vstv %s89
      %v189 = vadd.s32 %v188, %v185
      %v190 = vadd.s32 %v187, %v189
      %vm191 = vcmp.lt.s32.totalorder %v189, 1
      %v192 = vstv %s110
      %vm193 = vcmp.lt.s32.totalorder %v190, %v192
      %vm194 = vmand %vm191, %vm193
      %p195 = scmp.lt.s32.totalorder %s89, 1
      %s196 = scalar_select %p195, 1, 0
      %v197 = vstv %s196
      %vm198 = vcmp.eq.s32.totalorder %v197, 1
      %vm199 = vmand %vm194, %vm198
      %v200 = vsel %vm199, %v183, 0.0
      %v201 = vld [vmem:[%s5] sm:$0xff]
      %v202 = vadd.f32 %v201, %v200
      %vm203 = vcmask 7168
      %204 = vst.msk [vmem:[%s5] sm:$0xff] %vm203, %v202
    $region33: #{reseau1_forward.1} parent=1 // pred_fallthru
      _
    %p205 = scmp.lt.s32.totalorder %s89, 0
    // Predicated region
    $region34: #{reseau1_forward.1} parent=1 // pred_check
      %p206 = pneg %p205
    $region35: #{reseau1_forward.1} parent=1 // pred_check_branch
      %208 = sbr.rel (%p206) target = $region37
    $region36: #{reseau1_forward.1} parent=1 // pred_region
      %v209 = vld [vmem:[%s75] sm:$0xff]
      %v210 = vstv %s96
      %v211 = vmul.f32 %v209, %v210
      %s212 = scalar_lea.vmem %s75, 8
      %v213 = vld [vmem:[%s212] sm:$0xff]
      %v214 = vstv %s97
      %v215 = vmul.f32 %v213, %v214
      %v216 = vadd.f32 %v211, %v215
      %s217 = scalar_lea.vmem %s75, 16
      %v218 = vld [vmem:[%s217] sm:$0xff]
      %v219 = vstv %s98
      %v220 = vmul.f32 %v218, %v219
      %v221 = vadd.f32 %v216, %v220
      %s222 = scalar_lea.vmem %s75, 24
      %v223 = vld [vmem:[%s222] sm:$0xff]
      %v224 = vstv %s99
      %v225 = vmul.f32 %v223, %v224
      %v226 = vadd.f32 %v221, %v225
      %s227 = scalar_lea.vmem %s75, 32
      %v228 = vld [vmem:[%s227] sm:$0xff]
      %v229 = vstv %s100
      %v230 = vmul.f32 %v228, %v229
      %v231 = vadd.f32 %v226, %v230
      %s232 = scalar_lea.vmem %s75, 40
      %v233 = vld [vmem:[%s232] sm:$0xff]
      %v234 = vstv %s101
      %v235 = vmul.f32 %v233, %v234
      %v236 = vadd.f32 %v231, %v235
      %s237 = scalar_lea.vmem %s75, 48
      %v238 = vld [vmem:[%s237] sm:$0xff]
      %v239 = vstv %s102
      %v240 = vmul.f32 %v238, %v239
      %v241 = vadd.f32 %v236, %v240
      %s242 = scalar_lea.vmem %s75, 56
      %v243 = vld [vmem:[%s242] sm:$0xff]
      %v244 = vstv %s103
      %v245 = vmul.f32 %v243, %v244
      %v246 = vadd.f32 %v241, %v245
      %s247 = scalar_lea.vmem %s75, 64
      %v248 = vld [vmem:[%s247] sm:$0xff]
      %v249 = vstv %s104
      %v250 = vmul.f32 %v248, %v249
      %v251 = vadd.f32 %v246, %v250
      %s252 = scalar_lea.vmem %s75, 72
      %v253 = vld [vmem:[%s252] sm:$0xff]
      %v254 = vstv %s105
      %v255 = vmul.f32 %v253, %v254
      %v256 = vadd.f32 %v251, %v255
      %s257 = scalar_lea.vmem %s75, 80
      %v258 = vld [vmem:[%s257] sm:$0xff]
      %v259 = vstv %s106
      %v260 = vmul.f32 %v258, %v259
      %v261 = vadd.f32 %v256, %v260
      %s262 = scalar_lea.vmem %s75, 88
      %v263 = vld [vmem:[%s262] sm:$0xff]
      %v264 = vstv %s107
      %v265 = vmul.f32 %v263, %v264
      %v266 = vadd.f32 %v261, %v265
      %s267 = scalar_lea.vmem %s75, 96
      %v268 = vld [vmem:[%s267] sm:$0xff]
      %v269 = vstv %s108
      %v270 = vmul.f32 %v268, %v269
      %v271 = vadd.f32 %v266, %v270
      %v272 = vstv %s109
      %v273 = vadd.f32 %v271, %v272
      %v274 = vtanh.pop %v273
      %v275 = vld [vmem:[%s85] sm:$0xff]
      %v276 = vsub.f32 %v274, %v275
      %v277 = vmul.f32 %v276, %v276
      %v278 = vld [vmem:[%s5] sm:$0xff]
      %v279 = vadd.f32 %v278, %v277
      %vm280 = vcmask 7168
      %281 = vst.msk [vmem:[%s5] sm:$0xff] %vm280, %v279
    $region37: #{reseau1_forward.1} parent=1 // pred_fallthru
      _
    // Predicated region
    $region38: #{reseau1_forward.1} parent=1 // pred_check
      _
    $region39: #{reseau1_forward.1} parent=1 // pred_check_branch
      %283 = sbr.rel (0) target = $region41
    $region40: #{reseau1_forward.1} parent=1 // pred_region
      _
    $region41: #{reseau1_forward.1} parent=1 // pred_fallthru
      _
    // Predicated region
    $region42: #{reseau1_forward.1} parent=1 // pred_check
      _
    $region43: #{reseau1_forward.1} parent=1 // pred_check_branch
      %285 = sbr.rel (0) target = $region45
    $region44: #{reseau1_forward.1} parent=1 // pred_region
      _
    $region45: #{reseau1_forward.1} parent=1 // pred_fallthru
      _
    %286 = vsyncpa [#allocation5], 1

</llo_original>
